<compile_context>
chip_gen: v6e
topology: v6e:2x2x1
jax: 0.10.0
libtpu: 0.0.40
codegen_flags: <defaults>
</compile_context>

<pallas_src>
import numpy as np
import jax
import jax.numpy as jnp
from jax.experimental import pallas as pl
from jax.experimental.pallas import tpu as pltpu


# ----------------------------------------------------------------------------
# One-time host-side parameter prep (NOT in the per-call hot path)
# ----------------------------------------------------------------------------
def conv7_to_matmul_operator(w7, H, W):
    """Build M (H*W, H*W) such that row_vec(m) @ M equals
    Conv2d(1,1,7,padding=3,bias=False)(m) flattened (PyTorch cross-correlation,
    zero padding)."""
    w = np.asarray(w7, dtype=np.float32)
    K = w.shape[0]
    p = K // 2
    HW = H * W
    M = np.zeros((HW, HW), dtype=np.float32)
    ys, xs = np.meshgrid(np.arange(H), np.arange(W), indexing="ij")
    dst = ys * W + xs
    for dy in range(K):
        for dx in range(K):
            yi = ys + dy - p
            xi = xs + dx - p
            ok = (yi >= 0) & (yi < H) & (xi >= 0) & (xi < W)
            M[(yi * W + xi)[ok], dst[ok]] += w[dy, dx]
    return M


def prepare_cmfm(params, H, W, op_dtype=jnp.bfloat16):
    """Called ONCE at setup.  Fuses the two 7x7 spatial-attention convs into a
    single dense (HW, 2*HW) matmul operator (default bf16; pass f32 for tighter
    accuracy) and pre-transposes the 1x1-conv channel-attention weights to the
    (C, Cr) layout the kernel uses."""
    m_r = conv7_to_matmul_operator(params["w7_r"], H, W)
    m_d = conv7_to_matmul_operator(params["w7_d"], H, W)
    mconv = jnp.asarray(np.concatenate([m_r, m_d], axis=1), dtype=op_dtype)
    return dict(
        mconv=mconv,                              # (HW, 2*HW)
        w1t_r=jnp.asarray(params["w1_r"]).T,      # (C, Cr)
        w2_r=jnp.asarray(params["w2_r"]),         # (C, Cr)
        w1t_d=jnp.asarray(params["w1_d"]).T,      # (C, Cr)
        w2_d=jnp.asarray(params["w2_d"]),         # (C, Cr)
    )


def init_params(key, C):
    assert C >= 16, "ChannelAttention uses in_planes // 16 hidden channels"
    Cr = C // 16
    ks = jax.random.split(key, 6)
    b7 = 1.0 / 7.0                      # kaiming-uniform-ish, fan_in = 49
    b1 = 1.0 / float(np.sqrt(C))        # fc1: Conv2d(C, Cr, 1)
    b2 = 1.0 / float(np.sqrt(Cr))       # fc2: Conv2d(Cr, C, 1)
    return dict(
        w7_r=jax.random.uniform(ks[0], (7, 7), jnp.float32, -b7, b7),
        w7_d=jax.random.uniform(ks[1], (7, 7), jnp.float32, -b7, b7),
        w1_r=jax.random.uniform(ks[2], (Cr, C), jnp.float32, -b1, b1),
        w1_d=jax.random.uniform(ks[3], (Cr, C), jnp.float32, -b1, b1),
        w2_r=jax.random.uniform(ks[4], (C, Cr), jnp.float32, -b2, b2),
        w2_d=jax.random.uniform(ks[5], (C, Cr), jnp.float32, -b2, b2),
    )


# ----------------------------------------------------------------------------
# Pallas kernel
# ----------------------------------------------------------------------------
def cmfm_kernel(r_ref, d_ref, mconv_ref, w1r_ref, w2r_ref, w1d_ref, w2d_ref,
                out_ref):
    bc, C, HW = r_ref.shape

    # Elementwise math stays in f32 (v5e VPU/EUP have no native bf16).
    r = r_ref[...].astype(jnp.float32)            # (bc, C, HW)
    d = d_ref[...].astype(jnp.float32)            # (bc, C, HW)

    # --- Fused spatial attention (both branches, whole batch block):
    # one vectorized sublane reduce -> (bc, HW) LHS, one MXU matmul against the
    # fused (HW, 2*HW) conv operator, f32 accumulation.
    max_map = jnp.max(r * d, axis=1)              # (bc, HW)
    sa = jax.nn.sigmoid(
        jnp.dot(max_map.astype(mconv_ref.dtype), mconv_ref[...],
                preferred_element_type=jnp.float32))          # (bc, 2*HW) f32
    sa_r = sa[:, 0:HW][:, None, :]                # (bc, 1, HW)  RFEM spatial att
    sa_d = sa[:, HW:2 * HW][:, None, :]           # (bc, 1, HW)  DFEM spatial att

    def channel_attention(x, w1t, w2):
        # x: (bc, C, HW); w1t, w2: (C, Cr).  Batched pure VPU/XLU path — no
        # tiny MXU GEMVs.  sigmoid(fc2(relu(fc1(AdaptiveMaxPool2d(1)(x))))),
        # no bias.
        pooled = jnp.max(x, axis=2)                                       # (bc, C)
        hidden = jnp.sum(pooled[:, :, None] * w1t[None, :, :], axis=1)    # (bc, Cr)
        hidden = jnp.maximum(hidden, 0.0)                                 # ReLU
        logits = jnp.sum(hidden[:, None, :] * w2[None, :, :], axis=2)     # (bc, C)
        return jax.nn.sigmoid(logits)[:, :, None]                         # (bc, C, 1)

    # RFEM branch: r_f = r + r*sa ; fr = r * CA(r_f)
    fr = r * channel_attention(r + r * sa_r, w1r_ref[...], w2r_ref[...])
    # DFEM branch: d_f = d + d*sa ; fd = d * CA(d_f)
    fd = d * channel_attention(d + d * sa_d, w1d_ref[...], w2d_ref[...])

    out_ref[:, 0:C, :] = (fr * fd).astype(out_ref.dtype)       # mul_fea
    out_ref[:, C:2 * C, :] = (fr + fd).astype(out_ref.dtype)   # add_fea


def _pick_batch_block(B, max_bc=32):
    """Batch rows folded into one grid step (one MXU matmul with M=bc).
    Single-TensorCore chips (v5e/v6e): one fat step (bc as large as divisors of
    B allow, capped).  Multi-TC chips (megacore v4/v5p, v7x): keep an even
    number of >=2 grid steps so both cores get equal work, maximizing bc."""
    try:
        kind = jax.devices()[0].device_kind.lower()
    except Exception:  # pragma: no cover - defensive
        kind = ""
    multi_tc = any(t in kind for t in ("v4", "v5p", "v7", "7x"))

    divisors = [x for x in range(1, B + 1) if B % x == 0]
    if multi_tc and B >= 2:
        cands = [x for x in divisors if x <= max_bc and (B // x) % 2 == 0]
        if cands:
            return max(cands)
    cands = [x for x in divisors if x <= max_bc]
    return max(cands) if cands else 1


def cmfm_pallas(r, d, prep):
    B, C, H, W = r.shape
    HW = H * W
    Cr = prep["w1t_r"].shape[1]
    bc = _pick_batch_block(B)
    r2 = r.reshape(B, C, HW)
    d2 = d.reshape(B, C, HW)

    out = pl.pallas_call(
        cmfm_kernel,
        out_shape=jax.ShapeDtypeStruct((B, 2 * C, HW), r.dtype),
        grid_spec=pltpu.PrefetchScalarGridSpec(
            num_scalar_prefetch=0,
            grid=(B // bc,),
            in_specs=[
                pl.BlockSpec((bc, C, HW), lambda b: (b, 0, 0)),        # r
                pl.BlockSpec((bc, C, HW), lambda b: (b, 0, 0)),        # d
                # Grid-invariant operands: constant block index, so the
                # pipeline keeps them resident instead of re-DMAing per step.
                pl.BlockSpec((HW, 2 * HW), lambda b: (0, 0)),          # fused conv op
                pl.BlockSpec((C, Cr), lambda b: (0, 0)),               # w1^T (RFEM)
                pl.BlockSpec((C, Cr), lambda b: (0, 0)),               # w2   (RFEM)
                pl.BlockSpec((C, Cr), lambda b: (0, 0)),               # w1^T (DFEM)
                pl.BlockSpec((C, Cr), lambda b: (0, 0)),               # w2   (DFEM)
            ],
            out_specs=pl.BlockSpec((bc, 2 * C, HW), lambda b: (b, 0, 0)),
        ),
        compiler_params=pltpu.CompilerParams(
            # TODO(synk): on v7x verify "parallel" actually shards the batch
            # axis across both TensorCores (check the Mosaic dump); if not,
            # switch to an explicit core-parallel leading axis.
            dimension_semantics=("parallel",),
            vmem_limit_bytes=48 * 1024 * 1024,
        ),
    )(r2, d2, prep["mconv"], prep["w1t_r"], prep["w2_r"],
      prep["w1t_d"], prep["w2_d"])
    return out.reshape(B, 2 * C, H, W)


# ----------------------------------------------------------------------------
# Pure-JAX reference (mirrors the PyTorch module semantics)
# ----------------------------------------------------------------------------
def cmfm_ref(r, d, params):
    hi = jax.lax.Precision.HIGHEST

    def spatial_attn(x, w7):
        m = jnp.max(x, axis=1, keepdims=True)                    # (B,1,H,W)
        y = jax.lax.conv_general_dilated(
            m, w7[None, None, :, :], window_strides=(1, 1),
            padding=((3, 3), (3, 3)),
            dimension_numbers=("NCHW", "OIHW", "NCHW"),
            precision=hi)
        return jax.nn.sigmoid(y)

    def channel_attn(x, w1, w2):
        p = jnp.max(x, axis=(2, 3), keepdims=True)               # (B,C,1,1)
        h = jnp.maximum(jnp.einsum("rc,bcij->brij", w1, p, precision=hi), 0.0)
        o = jnp.einsum("cr,brij->bcij", w2, h, precision=hi)
        return jax.nn.sigmoid(o)

    mul_fuse = r * d
    # RFEM
    sa_r = spatial_attn(mul_fuse, params["w7_r"])
    r_f = r + r * sa_r
    fr = r * channel_attn(r_f, params["w1_r"], params["w2_r"])
    # DFEM
    sa_d = spatial_attn(mul_fuse, params["w7_d"])
    d_f = d + d * sa_d
    fd = d * channel_attn(d_f, params["w1_d"], params["w2_d"])
    return jnp.concatenate([fr * fd, fr + fd], axis=1)


# ----------------------------------------------------------------------------
if __name__ == "__main__":
    key = jax.random.PRNGKey(0)
    kr, kd, kp = jax.random.split(key, 3)

    B, C, H, W = 2, 16, 16, 16            # infeature = 16 (smallest valid for //16)
    r = jax.random.normal(kr, (B, C, H, W), jnp.float32)
    d = jax.random.normal(kd, (B, C, H, W), jnp.float32)
    params = init_params(kp, C)

    prep = prepare_cmfm(params, H, W)     # one-time; hoisted off the hot path
    fwd = jax.jit(cmfm_pallas)
    out = jax.block_until_ready(fwd(r, d, prep))

    ref = jax.block_until_ready(cmfm_ref(r, d, params))
    assert out.shape == (B, 2 * C, H, W)
    max_err = float(jnp.max(jnp.abs(out - ref)))
    if not bool(jnp.allclose(out, ref, atol=1e-2, rtol=1e-2)):
        raise AssertionError(f"Pallas kernel mismatch vs reference, max abs err={max_err}")
    print("KERNEL_OK")
</pallas_src>

<mosaic_0001>
module attributes {stable_mosaic.version = 11 : i64} {
  func.func @cmfm_kernel(%arg0: i32, %arg1: memref<2x16x256xf32, #tpu.memory_space<vmem>>, %arg2: memref<2x16x256xf32, #tpu.memory_space<vmem>>, %arg3: memref<256x512xbf16, #tpu.memory_space<vmem>>, %arg4: memref<16x1xf32, #tpu.memory_space<vmem>>, %arg5: memref<16x1xf32, #tpu.memory_space<vmem>>, %arg6: memref<16x1xf32, #tpu.memory_space<vmem>>, %arg7: memref<16x1xf32, #tpu.memory_space<vmem>>, %arg8: memref<2x32x256xf32, #tpu.memory_space<vmem>>) attributes {dimension_semantics = [#tpu.dimension_semantics<parallel>], iteration_bounds = array<i64: 1>, scalar_prefetch = 0 : i64, scratch_operands = 0 : i64, tpu.core_type = #tpu.core_type<tc>, window_params = [{transform_indices = @transform_0, window_bounds = array<i64: 2, 16, 256>}, {transform_indices = @transform_1, window_bounds = array<i64: 2, 16, 256>}, {pipeline_mode = #tpu.pipeline_mode<synchronous>, transform_indices = @transform_2, window_bounds = array<i64: 256, 512>}, {pipeline_mode = #tpu.pipeline_mode<synchronous>, transform_indices = @transform_3, window_bounds = array<i64: 16, 1>}, {pipeline_mode = #tpu.pipeline_mode<synchronous>, transform_indices = @transform_4, window_bounds = array<i64: 16, 1>}, {pipeline_mode = #tpu.pipeline_mode<synchronous>, transform_indices = @transform_5, window_bounds = array<i64: 16, 1>}, {pipeline_mode = #tpu.pipeline_mode<synchronous>, transform_indices = @transform_6, window_bounds = array<i64: 16, 1>}, {transform_indices = @transform_7, window_bounds = array<i64: 2, 32, 256>}]} {
    %c0 = arith.constant 0 : index
    %c0_0 = arith.constant 0 : index
    %c0_1 = arith.constant 0 : index
    %0 = vector.load %arg1[%c0, %c0_0, %c0_1] : memref<2x16x256xf32, #tpu.memory_space<vmem>>, vector<2x16x256xf32>
    %c0_2 = arith.constant 0 : index
    %c0_3 = arith.constant 0 : index
    %c0_4 = arith.constant 0 : index
    %1 = vector.load %arg2[%c0_2, %c0_3, %c0_4] : memref<2x16x256xf32, #tpu.memory_space<vmem>>, vector<2x16x256xf32>
    %2 = arith.mulf %0, %1 : vector<2x16x256xf32>
    %cst = arith.constant dense<0xFF800000> : vector<2x256xf32>
    %3 = vector.multi_reduction <maximumf>, %2, %cst [1] : vector<2x16x256xf32> to vector<2x256xf32>
    %4 = arith.truncf %3 : vector<2x256xf32> to vector<2x256xbf16>
    %c0_5 = arith.constant 0 : index
    %c0_6 = arith.constant 0 : index
    %5 = vector.load %arg3[%c0_5, %c0_6] : memref<256x512xbf16, #tpu.memory_space<vmem>>, vector<256x512xbf16>
    %cst_7 = arith.constant dense<0.000000e+00> : vector<2x512xf32>
    %6 = tpu.matmul %4, %5, %cst_7 {dimension_numbers = #tpu.dot_dimension_numbers<[1], [0], [0], [1], [0, 0, 1, 1], [], []>} : vector<2x256xbf16>, vector<256x512xbf16>, vector<2x512xf32> -> vector<2x512xf32>
    %7 = arith.negf %6 : vector<2x512xf32>
    %8 = math.exp %7 : vector<2x512xf32>
    %cst_8 = arith.constant 1.000000e+00 : f32
    %9 = vector.broadcast %cst_8 : f32 to vector<2x512xf32>
    %10 = arith.addf %9, %8 : vector<2x512xf32>
    %11 = arith.divf %9, %10 : vector<2x512xf32>
    %12 = vector.extract_strided_slice %11 {offsets = [0, 0], sizes = [2, 256], strides = [1, 1]} : vector<2x512xf32> to vector<2x256xf32>
    %13 = vector.shape_cast %12 : vector<2x256xf32> to vector<2x1x256xf32>
    %14 = vector.extract_strided_slice %11 {offsets = [0, 256], sizes = [2, 256], strides = [1, 1]} : vector<2x512xf32> to vector<2x256xf32>
    %15 = vector.shape_cast %14 : vector<2x256xf32> to vector<2x1x256xf32>
    %16 = vector.broadcast %13 : vector<2x1x256xf32> to vector<2x16x256xf32>
    %17 = arith.mulf %0, %16 : vector<2x16x256xf32>
    %18 = arith.addf %0, %17 : vector<2x16x256xf32>
    %c0_9 = arith.constant 0 : index
    %c0_10 = arith.constant 0 : index
    %19 = vector.load %arg4[%c0_9, %c0_10] : memref<16x1xf32, #tpu.memory_space<vmem>>, vector<16x1xf32>
    %c0_11 = arith.constant 0 : index
    %c0_12 = arith.constant 0 : index
    %20 = vector.load %arg5[%c0_11, %c0_12] : memref<16x1xf32, #tpu.memory_space<vmem>>, vector<16x1xf32>
    %cst_13 = arith.constant dense<0xFF800000> : vector<2x16xf32>
    %21 = vector.multi_reduction <maximumf>, %18, %cst_13 [2] : vector<2x16x256xf32> to vector<2x16xf32>
    %22 = vector.shape_cast %21 : vector<2x16xf32> to vector<2x16x1xf32>
    %23 = vector.shape_cast %19 : vector<16x1xf32> to vector<1x16x1xf32>
    %24 = vector.broadcast %23 : vector<1x16x1xf32> to vector<2x16x1xf32>
    %25 = arith.mulf %22, %24 : vector<2x16x1xf32>
    %cst_14 = arith.constant dense<0.000000e+00> : vector<2x1xf32>
    %26 = vector.multi_reduction <add>, %25, %cst_14 [1] : vector<2x16x1xf32> to vector<2x1xf32>
    %cst_15 = arith.constant 0.000000e+00 : f32
    %27 = vector.broadcast %cst_15 : f32 to vector<2x1xf32>
    %28 = arith.maximumf %26, %27 : vector<2x1xf32>
    %29 = vector.shape_cast %28 : vector<2x1xf32> to vector<2x1x1xf32>
    %30 = vector.shape_cast %20 : vector<16x1xf32> to vector<1x16x1xf32>
    %31 = vector.broadcast %29 : vector<2x1x1xf32> to vector<2x16x1xf32>
    %32 = vector.broadcast %30 : vector<1x16x1xf32> to vector<2x16x1xf32>
    %33 = arith.mulf %31, %32 : vector<2x16x1xf32>
    %cst_16 = arith.constant dense<0.000000e+00> : vector<2x16xf32>
    %34 = vector.multi_reduction <add>, %33, %cst_16 [2] : vector<2x16x1xf32> to vector<2x16xf32>
    %35 = arith.negf %34 : vector<2x16xf32>
    %36 = math.exp %35 : vector<2x16xf32>
    %cst_17 = arith.constant 1.000000e+00 : f32
    %37 = vector.broadcast %cst_17 : f32 to vector<2x16xf32>
    %38 = arith.addf %37, %36 : vector<2x16xf32>
    %39 = arith.divf %37, %38 : vector<2x16xf32>
    %40 = vector.shape_cast %39 : vector<2x16xf32> to vector<2x16x1xf32>
    %41 = vector.broadcast %40 : vector<2x16x1xf32> to vector<2x16x256xf32>
    %42 = arith.mulf %0, %41 : vector<2x16x256xf32>
    %43 = vector.broadcast %15 : vector<2x1x256xf32> to vector<2x16x256xf32>
    %44 = arith.mulf %1, %43 : vector<2x16x256xf32>
    %45 = arith.addf %1, %44 : vector<2x16x256xf32>
    %c0_18 = arith.constant 0 : index
    %c0_19 = arith.constant 0 : index
    %46 = vector.load %arg6[%c0_18, %c0_19] : memref<16x1xf32, #tpu.memory_space<vmem>>, vector<16x1xf32>
    %c0_20 = arith.constant 0 : index
    %c0_21 = arith.constant 0 : index
    %47 = vector.load %arg7[%c0_20, %c0_21] : memref<16x1xf32, #tpu.memory_space<vmem>>, vector<16x1xf32>
    %cst_22 = arith.constant dense<0xFF800000> : vector<2x16xf32>
    %48 = vector.multi_reduction <maximumf>, %45, %cst_22 [2] : vector<2x16x256xf32> to vector<2x16xf32>
    %49 = vector.shape_cast %48 : vector<2x16xf32> to vector<2x16x1xf32>
    %50 = vector.shape_cast %46 : vector<16x1xf32> to vector<1x16x1xf32>
    %51 = vector.broadcast %50 : vector<1x16x1xf32> to vector<2x16x1xf32>
    %52 = arith.mulf %49, %51 : vector<2x16x1xf32>
    %cst_23 = arith.constant dense<0.000000e+00> : vector<2x1xf32>
    %53 = vector.multi_reduction <add>, %52, %cst_23 [1] : vector<2x16x1xf32> to vector<2x1xf32>
    %cst_24 = arith.constant 0.000000e+00 : f32
    %54 = vector.broadcast %cst_24 : f32 to vector<2x1xf32>
    %55 = arith.maximumf %53, %54 : vector<2x1xf32>
    %56 = vector.shape_cast %55 : vector<2x1xf32> to vector<2x1x1xf32>
    %57 = vector.shape_cast %47 : vector<16x1xf32> to vector<1x16x1xf32>
    %58 = vector.broadcast %56 : vector<2x1x1xf32> to vector<2x16x1xf32>
    %59 = vector.broadcast %57 : vector<1x16x1xf32> to vector<2x16x1xf32>
    %60 = arith.mulf %58, %59 : vector<2x16x1xf32>
    %cst_25 = arith.constant dense<0.000000e+00> : vector<2x16xf32>
    %61 = vector.multi_reduction <add>, %60, %cst_25 [2] : vector<2x16x1xf32> to vector<2x16xf32>
    %62 = arith.negf %61 : vector<2x16xf32>
    %63 = math.exp %62 : vector<2x16xf32>
    %cst_26 = arith.constant 1.000000e+00 : f32
    %64 = vector.broadcast %cst_26 : f32 to vector<2x16xf32>
    %65 = arith.addf %64, %63 : vector<2x16xf32>
    %66 = arith.divf %64, %65 : vector<2x16xf32>
    %67 = vector.shape_cast %66 : vector<2x16xf32> to vector<2x16x1xf32>
    %68 = vector.broadcast %67 : vector<2x16x1xf32> to vector<2x16x256xf32>
    %69 = arith.mulf %1, %68 : vector<2x16x256xf32>
    %70 = arith.mulf %42, %69 : vector<2x16x256xf32>
    %c0_27 = arith.constant 0 : index
    %c0_28 = arith.constant 0 : index
    %c0_29 = arith.constant 0 : index
    %71 = vector.load %arg8[%c0_27, %c0_28, %c0_29] : memref<2x32x256xf32, #tpu.memory_space<vmem>>, vector<2x16x256xf32>
    tpu.vector_store %arg8[%c0_27, %c0_28, %c0_29], %70 {strides = array<i32>} : memref<2x32x256xf32, #tpu.memory_space<vmem>>, vector<2x16x256xf32>,
    %72 = arith.addf %42, %69 : vector<2x16x256xf32>
    %c0_30 = arith.constant 0 : index
    %c16 = arith.constant 16 : index
    %c0_31 = arith.constant 0 : index
    %73 = vector.load %arg8[%c0_30, %c16, %c0_31] : memref<2x32x256xf32, #tpu.memory_space<vmem>>, vector<2x16x256xf32>
    tpu.vector_store %arg8[%c0_30, %c16, %c0_31], %72 {strides = array<i32>} : memref<2x32x256xf32, #tpu.memory_space<vmem>>, vector<2x16x256xf32>,
    return
  }
  func.func @transform_0(%arg0: i32) -> (i32, i32, i32) {
    %c0_i32 = arith.constant 0 : i32
    %c0_i32_0 = arith.constant 0 : i32
    %c0_i32_1 = arith.constant 0 : i32
    return %arg0, %c0_i32, %c0_i32_0 : i32, i32, i32
  }
  func.func @transform_1(%arg0: i32) -> (i32, i32, i32) {
    %c0_i32 = arith.constant 0 : i32
    %c0_i32_0 = arith.constant 0 : i32
    %c0_i32_1 = arith.constant 0 : i32
    return %arg0, %c0_i32, %c0_i32_0 : i32, i32, i32
  }
  func.func @transform_2(%arg0: i32) -> (i32, i32) {
    %c0_i32 = arith.constant 0 : i32
    %c0_i32_0 = arith.constant 0 : i32
    %c0_i32_1 = arith.constant 0 : i32
    return %c0_i32, %c0_i32_0 : i32, i32
  }
  func.func @transform_3(%arg0: i32) -> (i32, i32) {
    %c0_i32 = arith.constant 0 : i32
    %c0_i32_0 = arith.constant 0 : i32
    %c0_i32_1 = arith.constant 0 : i32
    return %c0_i32, %c0_i32_0 : i32, i32
  }
  func.func @transform_4(%arg0: i32) -> (i32, i32) {
    %c0_i32 = arith.constant 0 : i32
    %c0_i32_0 = arith.constant 0 : i32
    %c0_i32_1 = arith.constant 0 : i32
    return %c0_i32, %c0_i32_0 : i32, i32
  }
  func.func @transform_5(%arg0: i32) -> (i32, i32) {
    %c0_i32 = arith.constant 0 : i32
    %c0_i32_0 = arith.constant 0 : i32
    %c0_i32_1 = arith.constant 0 : i32
    return %c0_i32, %c0_i32_0 : i32, i32
  }
  func.func @transform_6(%arg0: i32) -> (i32, i32) {
    %c0_i32 = arith.constant 0 : i32
    %c0_i32_0 = arith.constant 0 : i32
    %c0_i32_1 = arith.constant 0 : i32
    return %c0_i32, %c0_i32_0 : i32, i32
  }
  func.func @transform_7(%arg0: i32) -> (i32, i32, i32) {
    %c0_i32 = arith.constant 0 : i32
    %c0_i32_0 = arith.constant 0 : i32
    %c0_i32_1 = arith.constant 0 : i32
    return %arg0, %c0_i32, %c0_i32_0 : i32, i32, i32
  }
}

</mosaic_0001>

<llo_original>
// kernel: cmfm_pallas.1
$region0: #{cmfm_pallas.1}
  #allocation0 [shape = 'u32[]', space=smem, size = 0x4, offset = 0x4, fixed_abs, tag = 'smem constant byte address 0x4 - core index']
  #allocation1 [shape = 'u32[144,128]{1,0:T(1,128)}', space=vmem, size = 0x12000, scoped, tag = 'internal scratch']
  %s0 = inlined_call_operand.vmem [shape: f32[2,16,256], index: 0, kind: input, shape index: {}]
  %s1 = inlined_call_operand.vmem [shape: f32[2,16,256], index: 1, kind: input, shape index: {}]
  %s2 = inlined_call_operand.vmem [shape: bf16[256,512], index: 2, kind: input, shape index: {}]
  %s3 = inlined_call_operand.vmem [shape: f32[16,1], index: 3, kind: input, shape index: {}]
  %s4 = inlined_call_operand.vmem [shape: f32[16,1], index: 4, kind: input, shape index: {}]
  %s5 = inlined_call_operand.vmem [shape: f32[16,1], index: 5, kind: input, shape index: {}]
  %s6 = inlined_call_operand.vmem [shape: f32[16,1], index: 6, kind: input, shape index: {}]
  %s7 = inlined_call_operand.vmem [shape: f32[2,32,256], index: 7, kind: output, shape index: {}]
  %s8 = sld [smem:[#allocation0]]
  $region38: #{cmfm_pallas.1} parent=0
    _
  %s10 = ssub.s32 1, %s8
  %s11 = scalar_select 0, %s10, %s8
  // Predicated region
  $region2: #{cmfm_pallas.1} parent=0 // pred_check
    _
  $region3: #{cmfm_pallas.1} parent=0 // pred_check_branch
    %13 = sbr.rel (0) target = $region5
  $region4: #{cmfm_pallas.1} parent=0 // pred_region
    _
  $region5: #{cmfm_pallas.1} parent=0 // pred_fallthru
    _
  // Predicated region
  $region6: #{cmfm_pallas.1} parent=0 // pred_check
    _
  $region7: #{cmfm_pallas.1} parent=0 // pred_check_branch
    %15 = sbr.rel (0) target = $region9
  $region8: #{cmfm_pallas.1} parent=0 // pred_region
    _
  $region9: #{cmfm_pallas.1} parent=0 // pred_fallthru
    _
  // Predicated region
  $region10: #{cmfm_pallas.1} parent=0 // pred_check
    _
  $region11: #{cmfm_pallas.1} parent=0 // pred_check_branch
    %17 = sbr.rel (0) target = $region13
  $region12: #{cmfm_pallas.1} parent=0 // pred_region
    _
  $region13: #{cmfm_pallas.1} parent=0 // pred_fallthru
    _
  // Predicated region
  $region14: #{cmfm_pallas.1} parent=0 // pred_check
    _
  $region15: #{cmfm_pallas.1} parent=0 // pred_check_branch
    %19 = sbr.rel (0) target = $region17
  $region16: #{cmfm_pallas.1} parent=0 // pred_region
    _
  $region17: #{cmfm_pallas.1} parent=0 // pred_fallthru
    _
  // Predicated region
  $region18: #{cmfm_pallas.1} parent=0 // pred_check
    _
  $region19: #{cmfm_pallas.1} parent=0 // pred_check_branch
    %21 = sbr.rel (0) target = $region21
  $region20: #{cmfm_pallas.1} parent=0 // pred_region
    _
  $region21: #{cmfm_pallas.1} parent=0 // pred_fallthru
    _
  // Predicated region
  $region22: #{cmfm_pallas.1} parent=0 // pred_check
    _
  $region23: #{cmfm_pallas.1} parent=0 // pred_check_branch
    %23 = sbr.rel (0) target = $region25
  $region24: #{cmfm_pallas.1} parent=0 // pred_region
    _
  $region25: #{cmfm_pallas.1} parent=0 // pred_fallthru
    _
  // Predicated region
  $region26: #{cmfm_pallas.1} parent=0 // pred_check
    _
  $region27: #{cmfm_pallas.1} parent=0 // pred_check_branch
    %25 = sbr.rel (0) target = $region29
  $region28: #{cmfm_pallas.1} parent=0 // pred_region
    _
  $region29: #{cmfm_pallas.1} parent=0 // pred_fallthru
    _
  %v26 = vld [vmem:[%s0] sm:$0xff]
  %v27 = vld [vmem:[%s0 + $0x8] sm:$0xff]
  %v28 = vld [vmem:[%s0 + $0x10] sm:$0xff]
  %v29 = vld [vmem:[%s0 + $0x18] sm:$0xff]
  %v30 = vld [vmem:[%s0 + $0x20] sm:$0xff]
  %v31 = vld [vmem:[%s0 + $0x28] sm:$0xff]
  %v32 = vld [vmem:[%s0 + $0x30] sm:$0xff]
  %v33 = vld [vmem:[%s0 + $0x38] sm:$0xff]
  %v34 = vld [vmem:[%s1] sm:$0xff]
  %v35 = vld [vmem:[%s1 + $0x8] sm:$0xff]
  %v36 = vld [vmem:[%s1 + $0x10] sm:$0xff]
  %v37 = vld [vmem:[%s1 + $0x18] sm:$0xff]
  %v38 = vld [vmem:[%s1 + $0x20] sm:$0xff]
  %v39 = vld [vmem:[%s1 + $0x28] sm:$0xff]
  %v40 = vld [vmem:[%s1 + $0x30] sm:$0xff]
  %v41 = vld [vmem:[%s1 + $0x38] sm:$0xff]
  %v42 = vmul.f32 %v26, %v34
  %v43 = vmul.f32 %v27, %v35
  %v44 = vmul.f32 %v28, %v36
  %v45 = vmul.f32 %v29, %v37
  %v46 = vmul.f32 %v30, %v38
  %v47 = vmul.f32 %v31, %v39
  %v48 = vmul.f32 %v32, %v40
  %v49 = vmul.f32 %v33, %v41
  %v50 = vmax.f32 %v42, %v44
  %v51 = vrot.slane %v50, 4
  %v52 = vmax.f32 %v50, %v51
  %v53 = vrot.slane %v52, 2
  %v54 = vmax.f32 %v52, %v53
  %v55 = vrot.slane %v54, 1
  %v56 = vmax.f32 %v54, %v55
  %v57 = vmax.f32 %v43, %v45
  %v58 = vrot.slane %v57, 4
  %v59 = vmax.f32 %v57, %v58
  %v60 = vrot.slane %v59, 2
  %v61 = vmax.f32 %v59, %v60
  %v62 = vrot.slane %v61, 1
  %v63 = vmax.f32 %v61, %v62
  %v64 = vmax.f32 %v46, %v48
  %v65 = vrot.slane %v64, 4
  %v66 = vmax.f32 %v64, %v65
  %v67 = vrot.slane %v66, 2
  %v68 = vmax.f32 %v66, %v67
  %v69 = vrot.slane %v68, 1
  %v70 = vmax.f32 %v68, %v69
  %v71 = vmax.f32 %v47, %v49
  %v72 = vrot.slane %v71, 4
  %v73 = vmax.f32 %v71, %v72
  %v74 = vrot.slane %v73, 2
  %v75 = vmax.f32 %v73, %v74
  %v76 = vrot.slane %v75, 1
  %v77 = vmax.f32 %v75, %v76
  %v78 = vpack.c.bf16 %v56, %v56
  %v79 = vpack.c.bf16 %v63, %v63
  %v80 = vpack.c.bf16 %v70, %v70
  %v81 = vpack.c.bf16 %v77, %v77
  %v82 = vld [vmem:[%s2] sm:$0xff]
  %v83 = vld [vmem:[%s2 + $0x8] sm:$0xff]
  %v84 = vld [vmem:[%s2 + $0x10] sm:$0xff]
  %v85 = vld [vmem:[%s2 + $0x18] sm:$0xff]
  %v86 = vld [vmem:[%s2 + $0x20] sm:$0xff]
  %v87 = vld [vmem:[%s2 + $0x28] sm:$0xff]
  %v88 = vld [vmem:[%s2 + $0x30] sm:$0xff]
  %v89 = vld [vmem:[%s2 + $0x38] sm:$0xff]
  %v90 = vld [vmem:[%s2 + $0x40] sm:$0xff]
  %v91 = vld [vmem:[%s2 + $0x48] sm:$0xff]
  %v92 = vld [vmem:[%s2 + $0x50] sm:$0xff]
  %v93 = vld [vmem:[%s2 + $0x58] sm:$0xff]
  %v94 = vld [vmem:[%s2 + $0x60] sm:$0xff]
  %v95 = vld [vmem:[%s2 + $0x68] sm:$0xff]
  %v96 = vld [vmem:[%s2 + $0x70] sm:$0xff]
  %v97 = vld [vmem:[%s2 + $0x78] sm:$0xff]
  %v98 = vld [vmem:[%s2 + $0x80] sm:$0xff]
  %v99 = vld [vmem:[%s2 + $0x88] sm:$0xff]
  %v100 = vld [vmem:[%s2 + $0x90] sm:$0xff]
  %v101 = vld [vmem:[%s2 + $0x98] sm:$0xff]
  %v102 = vld [vmem:[%s2 + $0xa0] sm:$0xff]
  %v103 = vld [vmem:[%s2 + $0xa8] sm:$0xff]
  %v104 = vld [vmem:[%s2 + $0xb0] sm:$0xff]
  %v105 = vld [vmem:[%s2 + $0xb8] sm:$0xff]
  %v106 = vld [vmem:[%s2 + $0xc0] sm:$0xff]
  %v107 = vld [vmem:[%s2 + $0xc8] sm:$0xff]
  %v108 = vld [vmem:[%s2 + $0xd0] sm:$0xff]
  %v109 = vld [vmem:[%s2 + $0xd8] sm:$0xff]
  %v110 = vld [vmem:[%s2 + $0xe0] sm:$0xff]
  %v111 = vld [vmem:[%s2 + $0xe8] sm:$0xff]
  %v112 = vld [vmem:[%s2 + $0xf0] sm:$0xff]
  %v113 = vld [vmem:[%s2 + $0xf8] sm:$0xff]
  %v114 = vld [vmem:[%s2 + $0x100] sm:$0xff]
  %v115 = vld [vmem:[%s2 + $0x108] sm:$0xff]
  %v116 = vld [vmem:[%s2 + $0x110] sm:$0xff]
  %v117 = vld [vmem:[%s2 + $0x118] sm:$0xff]
  %v118 = vld [vmem:[%s2 + $0x120] sm:$0xff]
  %v119 = vld [vmem:[%s2 + $0x128] sm:$0xff]
  %v120 = vld [vmem:[%s2 + $0x130] sm:$0xff]
  %v121 = vld [vmem:[%s2 + $0x138] sm:$0xff]
  %v122 = vld [vmem:[%s2 + $0x140] sm:$0xff]
  %v123 = vld [vmem:[%s2 + $0x148] sm:$0xff]
  %v124 = vld [vmem:[%s2 + $0x150] sm:$0xff]
  %v125 = vld [vmem:[%s2 + $0x158] sm:$0xff]
  %v126 = vld [vmem:[%s2 + $0x160] sm:$0xff]
  %v127 = vld [vmem:[%s2 + $0x168] sm:$0xff]
  %v128 = vld [vmem:[%s2 + $0x170] sm:$0xff]
  %v129 = vld [vmem:[%s2 + $0x178] sm:$0xff]
  %v130 = vld [vmem:[%s2 + $0x180] sm:$0xff]
  %v131 = vld [vmem:[%s2 + $0x188] sm:$0xff]
  %v132 = vld [vmem:[%s2 + $0x190] sm:$0xff]
  %v133 = vld [vmem:[%s2 + $0x198] sm:$0xff]
  %v134 = vld [vmem:[%s2 + $0x1a0] sm:$0xff]
  %v135 = vld [vmem:[%s2 + $0x1a8] sm:$0xff]
  %v136 = vld [vmem:[%s2 + $0x1b0] sm:$0xff]
  %v137 = vld [vmem:[%s2 + $0x1b8] sm:$0xff]
  %v138 = vld [vmem:[%s2 + $0x1c0] sm:$0xff]
  %v139 = vld [vmem:[%s2 + $0x1c8] sm:$0xff]
  %v140 = vld [vmem:[%s2 + $0x1d0] sm:$0xff]
  %v141 = vld [vmem:[%s2 + $0x1d8] sm:$0xff]
  %v142 = vld [vmem:[%s2 + $0x1e0] sm:$0xff]
  %v143 = vld [vmem:[%s2 + $0x1e8] sm:$0xff]
  %v144 = vld [vmem:[%s2 + $0x1f0] sm:$0xff]
  %v145 = vld [vmem:[%s2 + $0x1f8] sm:$0xff]
  %v150 = vunpack.c.l.b16 %v78
  %v151 = vunpack.c.l.b16 %v79
  %v152 = vunpack.c.l.b16 %v80
  %v153 = vunpack.c.l.b16 %v81
  %vm154 = vcmask 1041409
  %v155 = vsel %vm154, %v152, %v150
  %v156 = vsel %vm154, %v153, %v151
  %v157 = vpack.c.b16 %v155, %v155
  %v158 = vpack.c.b16 %v156, %v156
  %v225 = vunpack.c.l.b16 %v82
  %v226 = vunpack.c.h.b16 %v82
  %v227 = vunpack.c.l.b16 %v83
  %v228 = vunpack.c.h.b16 %v83
  %v229 = vunpack.c.l.b16 %v84
  %v230 = vunpack.c.h.b16 %v84
  %v231 = vunpack.c.l.b16 %v85
  %v232 = vunpack.c.h.b16 %v85
  %v233 = vunpack.c.l.b16 %v86
  %v234 = vunpack.c.h.b16 %v86
  %v235 = vunpack.c.l.b16 %v87
  %v236 = vunpack.c.h.b16 %v87
  %v237 = vunpack.c.l.b16 %v88
  %v238 = vunpack.c.h.b16 %v88
  %v239 = vunpack.c.l.b16 %v89
  %v240 = vunpack.c.h.b16 %v89
  %v241 = vunpack.c.l.b16 %v90
  %v242 = vunpack.c.h.b16 %v90
  %v243 = vunpack.c.l.b16 %v91
  %v244 = vunpack.c.h.b16 %v91
  %v245 = vunpack.c.l.b16 %v92
  %v246 = vunpack.c.h.b16 %v92
  %v247 = vunpack.c.l.b16 %v93
  %v248 = vunpack.c.h.b16 %v93
  %v249 = vunpack.c.l.b16 %v94
  %v250 = vunpack.c.h.b16 %v94
  %v251 = vunpack.c.l.b16 %v95
  %v252 = vunpack.c.h.b16 %v95
  %v253 = vunpack.c.l.b16 %v96
  %v254 = vunpack.c.h.b16 %v96
  %v255 = vunpack.c.l.b16 %v97
  %v256 = vunpack.c.h.b16 %v97
  %v257 = vunpack.c.l.b16 %v98
  %v258 = vunpack.c.h.b16 %v98
  %v259 = vunpack.c.l.b16 %v99
  %v260 = vunpack.c.h.b16 %v99
  %v261 = vunpack.c.l.b16 %v100
  %v262 = vunpack.c.h.b16 %v100
  %v263 = vunpack.c.l.b16 %v101
  %v264 = vunpack.c.h.b16 %v101
  %v265 = vunpack.c.l.b16 %v102
  %v266 = vunpack.c.h.b16 %v102
  %v267 = vunpack.c.l.b16 %v103
  %v268 = vunpack.c.h.b16 %v103
  %v269 = vunpack.c.l.b16 %v104
  %v270 = vunpack.c.h.b16 %v104
  %v271 = vunpack.c.l.b16 %v105
  %v272 = vunpack.c.h.b16 %v105
  %v273 = vunpack.c.l.b16 %v106
  %v274 = vunpack.c.h.b16 %v106
  %v275 = vunpack.c.l.b16 %v107
  %v276 = vunpack.c.h.b16 %v107
  %v277 = vunpack.c.l.b16 %v108
  %v278 = vunpack.c.h.b16 %v108
  %v279 = vunpack.c.l.b16 %v109
  %v280 = vunpack.c.h.b16 %v109
  %v281 = vunpack.c.l.b16 %v110
  %v282 = vunpack.c.h.b16 %v110
  %v283 = vunpack.c.l.b16 %v111
  %v284 = vunpack.c.h.b16 %v111
  %v285 = vunpack.c.l.b16 %v112
  %v286 = vunpack.c.h.b16 %v112
  %v287 = vunpack.c.l.b16 %v113
  %v288 = vunpack.c.h.b16 %v113
  %v289 = vunpack.c.l.b16 %v114
  %v290 = vunpack.c.h.b16 %v114
  %v291 = vunpack.c.l.b16 %v115
  %v292 = vunpack.c.h.b16 %v115
  %v293 = vunpack.c.l.b16 %v116
  %v294 = vunpack.c.h.b16 %v116
  %v295 = vunpack.c.l.b16 %v117
  %v296 = vunpack.c.h.b16 %v117
  %v297 = vunpack.c.l.b16 %v118
  %v298 = vunpack.c.h.b16 %v118
  %v299 = vunpack.c.l.b16 %v119
  %v300 = vunpack.c.h.b16 %v119
  %v301 = vunpack.c.l.b16 %v120
  %v302 = vunpack.c.h.b16 %v120
  %v303 = vunpack.c.l.b16 %v121
  %v304 = vunpack.c.h.b16 %v121
  %v305 = vunpack.c.l.b16 %v122
  %v306 = vunpack.c.h.b16 %v122
  %v307 = vunpack.c.l.b16 %v123
  %v308 = vunpack.c.h.b16 %v123
  %v309 = vunpack.c.l.b16 %v124
  %v310 = vunpack.c.h.b16 %v124
  %v311 = vunpack.c.l.b16 %v125
  %v312 = vunpack.c.h.b16 %v125
  %v313 = vunpack.c.l.b16 %v126
  %v314 = vunpack.c.h.b16 %v126
  %v315 = vunpack.c.l.b16 %v127
  %v316 = vunpack.c.h.b16 %v127
  %v317 = vunpack.c.l.b16 %v128
  %v318 = vunpack.c.h.b16 %v128
  %v319 = vunpack.c.l.b16 %v129
  %v320 = vunpack.c.h.b16 %v129
  %v321 = vunpack.c.l.b16 %v130
  %v322 = vunpack.c.h.b16 %v130
  %v323 = vunpack.c.l.b16 %v131
  %v324 = vunpack.c.h.b16 %v131
  %v325 = vunpack.c.l.b16 %v132
  %v326 = vunpack.c.h.b16 %v132
  %v327 = vunpack.c.l.b16 %v133
  %v328 = vunpack.c.h.b16 %v133
  %v329 = vunpack.c.l.b16 %v134
  %v330 = vunpack.c.h.b16 %v134
  %v331 = vunpack.c.l.b16 %v135
  %v332 = vunpack.c.h.b16 %v135
  %v333 = vunpack.c.l.b16 %v136
  %v334 = vunpack.c.h.b16 %v136
  %v335 = vunpack.c.l.b16 %v137
  %v336 = vunpack.c.h.b16 %v137
  %v337 = vunpack.c.l.b16 %v138
  %v338 = vunpack.c.h.b16 %v138
  %v339 = vunpack.c.l.b16 %v139
  %v340 = vunpack.c.h.b16 %v139
  %v341 = vunpack.c.l.b16 %v140
  %v342 = vunpack.c.h.b16 %v140
  %v343 = vunpack.c.l.b16 %v141
  %v344 = vunpack.c.h.b16 %v141
  %v345 = vunpack.c.l.b16 %v142
  %v346 = vunpack.c.h.b16 %v142
  %v347 = vunpack.c.l.b16 %v143
  %v348 = vunpack.c.h.b16 %v143
  %v349 = vunpack.c.l.b16 %v144
  %v350 = vunpack.c.h.b16 %v144
  %v351 = vunpack.c.l.b16 %v145
  %v352 = vunpack.c.h.b16 %v145
  %v353 = vpack.c.b16 %v229, %v225
  %v354 = vpack.c.b16 %v230, %v226
  %v355 = vpack.c.b16 %v231, %v227
  %v356 = vpack.c.b16 %v232, %v228
  %v357 = vpack.c.b16 %v237, %v233
  %v358 = vpack.c.b16 %v238, %v234
  %v359 = vpack.c.b16 %v239, %v235
  %v360 = vpack.c.b16 %v240, %v236
  %v361 = vpack.c.b16 %v245, %v241
  %v362 = vpack.c.b16 %v246, %v242
  %v363 = vpack.c.b16 %v247, %v243
  %v364 = vpack.c.b16 %v248, %v244
  %v365 = vpack.c.b16 %v253, %v249
  %v366 = vpack.c.b16 %v254, %v250
  %v367 = vpack.c.b16 %v255, %v251
  %v368 = vpack.c.b16 %v256, %v252
  %v369 = vpack.c.b16 %v261, %v257
  %v370 = vpack.c.b16 %v262, %v258
  %v371 = vpack.c.b16 %v263, %v259
  %v372 = vpack.c.b16 %v264, %v260
  %v373 = vpack.c.b16 %v269, %v265
  %v374 = vpack.c.b16 %v270, %v266
  %v375 = vpack.c.b16 %v271, %v267
  %v376 = vpack.c.b16 %v272, %v268
  %v377 = vpack.c.b16 %v277, %v273
  %v378 = vpack.c.b16 %v278, %v274
  %v379 = vpack.c.b16 %v279, %v275
  %v380 = vpack.c.b16 %v280, %v276
  %v381 = vpack.c.b16 %v285, %v281
  %v382 = vpack.c.b16 %v286, %v282
  %v383 = vpack.c.b16 %v287, %v283
  %v384 = vpack.c.b16 %v288, %v284
  %v385 = vpack.c.b16 %v293, %v289
  %v386 = vpack.c.b16 %v294, %v290
  %v387 = vpack.c.b16 %v295, %v291
  %v388 = vpack.c.b16 %v296, %v292
  %v389 = vpack.c.b16 %v301, %v297
  %v390 = vpack.c.b16 %v302, %v298
  %v391 = vpack.c.b16 %v303, %v299
  %v392 = vpack.c.b16 %v304, %v300
  %v393 = vpack.c.b16 %v309, %v305
  %v394 = vpack.c.b16 %v310, %v306
  %v395 = vpack.c.b16 %v311, %v307
  %v396 = vpack.c.b16 %v312, %v308
  %v397 = vpack.c.b16 %v317, %v313
  %v398 = vpack.c.b16 %v318, %v314
  %v399 = vpack.c.b16 %v319, %v315
  %v400 = vpack.c.b16 %v320, %v316
  %v401 = vpack.c.b16 %v325, %v321
  %v402 = vpack.c.b16 %v326, %v322
  %v403 = vpack.c.b16 %v327, %v323
  %v404 = vpack.c.b16 %v328, %v324
  %v405 = vpack.c.b16 %v333, %v329
  %v406 = vpack.c.b16 %v334, %v330
  %v407 = vpack.c.b16 %v335, %v331
  %v408 = vpack.c.b16 %v336, %v332
  %v409 = vpack.c.b16 %v341, %v337
  %v410 = vpack.c.b16 %v342, %v338
  %v411 = vpack.c.b16 %v343, %v339
  %v412 = vpack.c.b16 %v344, %v340
  %v413 = vpack.c.b16 %v349, %v345
  %v414 = vpack.c.b16 %v350, %v346
  %v415 = vpack.c.b16 %v351, %v347
  %v416 = vpack.c.b16 %v352, %v348
  %481 = vmatprep.subr.bf16.mxu0 %v382
  %482 = vmatpush1.bf16.msra.mxu0 %v381
  %483 = vmatprep.subr.bf16.mxu0 %v378
  %484 = vmatpush1.bf16.msra.mxu0 %v377
  %485 = vmatprep.subr.bf16.mxu0 %v374
  %486 = vmatpush1.bf16.msra.mxu0 %v373
  %487 = vmatprep.subr.bf16.mxu0 %v370
  %488 = vmatpush1.bf16.msra.mxu0 %v369
  %489 = vmatprep.subr.bf16.mxu0 %v366
  %490 = vmatpush1.bf16.msra.mxu0 %v365
  %491 = vmatprep.subr.bf16.mxu0 %v362
  %492 = vmatpush1.bf16.msra.mxu0 %v361
  %493 = vmatprep.subr.bf16.mxu0 %v358
  %494 = vmatpush1.bf16.msra.mxu0 %v357
  %495 = vmatprep.subr.bf16.mxu0 %v354
  %496 = vmatpush1.bf16.msra.mxu0 %v353
  %497 = vmatprep.subr.bf16.mxu0 %v414
  %498 = vmatpush2.bf16.msra.mxu0 %v413
  %499 = vmatprep.subr.bf16.mxu0 %v410
  %500 = vmatpush2.bf16.msra.mxu0 %v409
  %501 = vmatprep.subr.bf16.mxu0 %v406
  %502 = vmatpush2.bf16.msra.mxu0 %v405
  %503 = vmatprep.subr.bf16.mxu0 %v402
  %504 = vmatpush2.bf16.msra.mxu0 %v401
  %505 = vmatprep.subr.bf16.mxu0 %v398
  %506 = vmatpush2.bf16.msra.mxu0 %v397
  %507 = vmatprep.subr.bf16.mxu0 %v394
  %508 = vmatpush2.bf16.msra.mxu0 %v393
  %509 = vmatprep.subr.bf16.mxu0 %v390
  %510 = vmatpush2.bf16.msra.mxu0 %v389
  %511 = vmatprep.subr.bf16.mxu0 %v386
  %512 = vmatpush2.bf16.msra.mxu0 %v385
  %513 = vmatprep.mubr.bf16.mxu0 %v158
  %514 = vmatmul.mubr.bf16.gmra.mxu0 %v157
  %v515 = vpop.f32.mrf.mxu0
  %v516 = vadd.f32 0.0, %v515
  %v517 = vpop.f32.mrf.mxu0
  %v518 = vadd.f32 0.0, %v517
  %v519 = vpop.f32.mrf.mxu0
  %v520 = vpop.f32.mrf.mxu0
  %521 = vdwg.mxu0
  %522 = vmatprep.subr.bf16.mxu0 %v384
  %523 = vmatpush1.bf16.msra.mxu0 %v383
  %524 = vmatprep.subr.bf16.mxu0 %v380
  %525 = vmatpush1.bf16.msra.mxu0 %v379
  %526 = vmatprep.subr.bf16.mxu0 %v376
  %527 = vmatpush1.bf16.msra.mxu0 %v375
  %528 = vmatprep.subr.bf16.mxu0 %v372
  %529 = vmatpush1.bf16.msra.mxu0 %v371
  %530 = vmatprep.subr.bf16.mxu0 %v368
  %531 = vmatpush1.bf16.msra.mxu0 %v367
  %532 = vmatprep.subr.bf16.mxu0 %v364
  %533 = vmatpush1.bf16.msra.mxu0 %v363
  %534 = vmatprep.subr.bf16.mxu0 %v360
  %535 = vmatpush1.bf16.msra.mxu0 %v359
  %536 = vmatprep.subr.bf16.mxu0 %v356
  %537 = vmatpush1.bf16.msra.mxu0 %v355
  %538 = vmatprep.subr.bf16.mxu0 %v416
  %539 = vmatpush2.bf16.msra.mxu0 %v415
  %540 = vmatprep.subr.bf16.mxu0 %v412
  %541 = vmatpush2.bf16.msra.mxu0 %v411
  %542 = vmatprep.subr.bf16.mxu0 %v408
  %543 = vmatpush2.bf16.msra.mxu0 %v407
  %544 = vmatprep.subr.bf16.mxu0 %v404
  %545 = vmatpush2.bf16.msra.mxu0 %v403
  %546 = vmatprep.subr.bf16.mxu0 %v400
  %547 = vmatpush2.bf16.msra.mxu0 %v399
  %548 = vmatprep.subr.bf16.mxu0 %v396
  %549 = vmatpush2.bf16.msra.mxu0 %v395
  %550 = vmatprep.subr.bf16.mxu0 %v392
  %551 = vmatpush2.bf16.msra.mxu0 %v391
  %552 = vmatprep.subr.bf16.mxu0 %v388
  %553 = vmatpush2.bf16.msra.mxu0 %v387
  %554 = vmatprep.mubr.bf16.mxu0 %v158
  %555 = vmatmul.mubr.bf16.gmra.mxu0 %v157
  %v556 = vpop.f32.mrf.mxu0
  %v557 = vadd.f32 0.0, %v556
  %v558 = vpop.f32.mrf.mxu0
  %v559 = vadd.f32 0.0, %v558
  %v560 = vpop.f32.mrf.mxu0
  %v561 = vpop.f32.mrf.mxu0
  %562 = vdwg.mxu0
  %v563 = vxor.u32 %v516, 2147483648
  %v564 = vxor.u32 %v518, 2147483648
  %v565 = vxor.u32 %v557, 2147483648
  %v566 = vxor.u32 %v559, 2147483648
  %v567 = vmul.f32 %v563, 1.442695
  %v568 = vpow.pop %v567
  %v569 = vmul.f32 %v564, 1.442695
  %v570 = vpow.pop %v569
  %v571 = vmul.f32 %v565, 1.442695
  %v572 = vpow.pop %v571
  %v573 = vmul.f32 %v566, 1.442695
  %v574 = vpow.pop %v573
  %v575 = vadd.f32 %v568, 1.0
  %v576 = vadd.f32 %v570, 1.0
  %v577 = vadd.f32 %v572, 1.0
  %v578 = vadd.f32 %v574, 1.0
  %v579 = vrcp.pop %v575
  %v580 = vmul.f32 1.0, %v579
  %v581 = vrcp.pop %v576
  %v582 = vmul.f32 1.0, %v581
  %v583 = vrcp.pop %v577
  %v584 = vmul.f32 1.0, %v583
  %v585 = vrcp.pop %v578
  %v586 = vmul.f32 1.0, %v585
  %v589 = vcombine.low %v580, %v582
  %v591 = vunpack.c.l.s4 1966171168
  %v592 = vunpack.c.0.s8 %v591
  %v593 = vlaneseq
  %v594 = vshrl.u32 %v593, 7
  %v595 = vsub.s32 %v592, %v594
  %v596 = vrot.slane %v589, %v595
  %v597 = vcombine.high %v596, %v596
  %v599 = vunpack.c.l.s4 1966171168
  %v600 = vunpack.c.0.s8 %v599
  %v601 = vlaneseq
  %v602 = vshrl.u32 %v601, 7
  %v603 = vsub.s32 %v600, %v602
  %v604 = vrot.slane %v596, %v603
  %v606 = vunpack.c.l.s4 1966171168
  %v607 = vunpack.c.0.s8 %v606
  %v608 = vlaneseq
  %v609 = vshrl.u32 %v608, 7
  %v610 = vsub.s32 %v607, %v609
  %v611 = vrot.slane %v597, %v610
  %v614 = vcombine.low %v584, %v586
  %v616 = vunpack.c.l.s4 1966171168
  %v617 = vunpack.c.0.s8 %v616
  %v618 = vlaneseq
  %v619 = vshrl.u32 %v618, 7
  %v620 = vsub.s32 %v617, %v619
  %v621 = vrot.slane %v614, %v620
  %v622 = vcombine.high %v621, %v621
  %v624 = vunpack.c.l.s4 1966171168
  %v625 = vunpack.c.0.s8 %v624
  %v626 = vlaneseq
  %v627 = vshrl.u32 %v626, 7
  %v628 = vsub.s32 %v625, %v627
  %v629 = vrot.slane %v621, %v628
  %v631 = vunpack.c.l.s4 1966171168
  %v632 = vunpack.c.0.s8 %v631
  %v633 = vlaneseq
  %v634 = vshrl.u32 %v633, 7
  %v635 = vsub.s32 %v632, %v634
  %v636 = vrot.slane %v622, %v635
  %v637 = vlaneseq
  %v638 = vshrl.u32 %v637, 7
  %v639 = vsub.s32 0, %v638
  %v640 = vrot.slane %v604, %v639
  %v641 = vlaneseq
  %v642 = vshrl.u32 %v641, 7
  %v643 = vsub.s32 1, %v642
  %v644 = vrot.slane %v604, %v643
  %v645 = vlaneseq
  %v646 = vshrl.u32 %v645, 7
  %v647 = vsub.s32 0, %v646
  %v648 = vrot.slane %v611, %v647
  %v649 = vlaneseq
  %v650 = vshrl.u32 %v649, 7
  %v651 = vsub.s32 1, %v650
  %v652 = vrot.slane %v611, %v651
  %v657 = vmul.f32 %v26, %v640
  %v658 = vmul.f32 %v27, %v644
  %v659 = vmul.f32 %v28, %v640
  %v660 = vmul.f32 %v29, %v644
  %v661 = vmul.f32 %v30, %v648
  %v662 = vmul.f32 %v31, %v652
  %v663 = vmul.f32 %v32, %v648
  %v664 = vmul.f32 %v33, %v652
  %v665 = vadd.f32 %v26, %v657
  %v666 = vadd.f32 %v27, %v658
  %v667 = vadd.f32 %v28, %v659
  %v668 = vadd.f32 %v29, %v660
  %v669 = vadd.f32 %v30, %v661
  %v670 = vadd.f32 %v31, %v662
  %v671 = vadd.f32 %v32, %v663
  %v672 = vadd.f32 %v33, %v664
  %v673 = vld [vmem:[%s3] sm:$0xff]
  %v674 = vld [vmem:[%s3 + $0x8] sm:$0xff]
  %v675 = vld [vmem:[%s4] sm:$0xff]
  %v676 = vld [vmem:[%s4 + $0x8] sm:$0xff]
  %v677 = vmax.f32 %v665, %v666
  %678 = vmax.xlane.f32.xlu0 %v677
  %v679 = vpop.xlane.xlu0 %678
  %v680 = vmax.f32 %v667, %v668
  %681 = vmax.xlane.f32.xlu0 %v680
  %v682 = vpop.xlane.xlu0 %681
  %v683 = vmax.f32 %v669, %v670
  %684 = vmax.xlane.f32.xlu0 %v683
  %v685 = vpop.xlane.xlu0 %684
  %v686 = vmax.f32 %v671, %v672
  %687 = vmax.xlane.f32.xlu0 %v686
  %v688 = vpop.xlane.xlu0 %687
  %v689 = vmul.f32 %v679, %v673
  %v690 = vmul.f32 %v682, %v674
  %v691 = vmul.f32 %v685, %v673
  %v692 = vmul.f32 %v688, %v674
  %vm693 = vcmask 7168
  %v694 = vsel %vm693, %v689, 0.0
  %v695 = vsel %vm693, %v690, 0.0
  %v696 = vadd.f32 %v694, %v695
  %v697 = vrot.slane %v696, 4
  %v698 = vadd.f32 %v696, %v697
  %v699 = vrot.slane %v698, 2
  %v700 = vadd.f32 %v698, %v699
  %v701 = vrot.slane %v700, 1
  %v702 = vadd.f32 %v700, %v701
  %v703 = vsel %vm693, %v691, 0.0
  %v704 = vsel %vm693, %v692, 0.0
  %v705 = vadd.f32 %v703, %v704
  %v706 = vrot.slane %v705, 4
  %v707 = vadd.f32 %v705, %v706
  %v708 = vrot.slane %v707, 2
  %v709 = vadd.f32 %v707, %v708
  %v710 = vrot.slane %v709, 1
  %v711 = vadd.f32 %v709, %v710
  %v712 = vmax.f32 %v702, 0.0
  %v713 = vmax.f32 %v711, 0.0
  %v714 = vmul.f32 %v712, %v675
  %v715 = vmul.f32 %v712, %v676
  %v716 = vmul.f32 %v713, %v675
  %v717 = vmul.f32 %v713, %v676
  %v718 = vadd.f32 %v714, 0.0
  %v719 = vadd.f32 %v715, 0.0
  %v720 = vadd.f32 %v716, 0.0
  %v721 = vadd.f32 %v717, 0.0
  %v722 = vxor.u32 %v718, 2147483648
  %v723 = vxor.u32 %v719, 2147483648
  %v724 = vxor.u32 %v720, 2147483648
  %v725 = vxor.u32 %v721, 2147483648
  %v726 = vmul.f32 %v722, 1.442695
  %v727 = vpow.pop %v726
  %v728 = vmul.f32 %v723, 1.442695
  %v729 = vpow.pop %v728
  %v730 = vmul.f32 %v724, 1.442695
  %v731 = vpow.pop %v730
  %v732 = vmul.f32 %v725, 1.442695
  %v733 = vpow.pop %v732
  %v734 = vadd.f32 %v727, 1.0
  %v735 = vadd.f32 %v729, 1.0
  %v736 = vadd.f32 %v731, 1.0
  %v737 = vadd.f32 %v733, 1.0
  %v738 = vrcp.pop %v734
  %v739 = vmul.f32 1.0, %v738
  %v740 = vrcp.pop %v735
  %v741 = vmul.f32 1.0, %v740
  %v742 = vrcp.pop %v736
  %v743 = vmul.f32 1.0, %v742
  %v744 = vrcp.pop %v737
  %v745 = vmul.f32 1.0, %v744
  %747 = vset.pattern.permute.xlu0 0
  %748 = vperm.xlu0 %747, %v739
  %v749 = vpop.permute.xlu0 %748
  %752 = vset.pattern.permute.xlu0 0
  %753 = vperm.xlu0 %752, %v741
  %v754 = vpop.permute.xlu0 %753
  %757 = vset.pattern.permute.xlu0 0
  %758 = vperm.xlu0 %757, %v743
  %v759 = vpop.permute.xlu0 %758
  %762 = vset.pattern.permute.xlu0 0
  %763 = vperm.xlu0 %762, %v745
  %v764 = vpop.permute.xlu0 %763
  %v766 = vmul.f32 %v26, %v749
  %v767 = vmul.f32 %v27, %v749
  %v768 = vmul.f32 %v28, %v754
  %v769 = vmul.f32 %v29, %v754
  %v770 = vmul.f32 %v30, %v759
  %v771 = vmul.f32 %v31, %v759
  %v772 = vmul.f32 %v32, %v764
  %v773 = vmul.f32 %v33, %v764
  %v774 = vlaneseq
  %v775 = vshrl.u32 %v774, 7
  %v776 = vsub.s32 0, %v775
  %v777 = vrot.slane %v629, %v776
  %v778 = vlaneseq
  %v779 = vshrl.u32 %v778, 7
  %v780 = vsub.s32 1, %v779
  %v781 = vrot.slane %v629, %v780
  %v782 = vlaneseq
  %v783 = vshrl.u32 %v782, 7
  %v784 = vsub.s32 0, %v783
  %v785 = vrot.slane %v636, %v784
  %v786 = vlaneseq
  %v787 = vshrl.u32 %v786, 7
  %v788 = vsub.s32 1, %v787
  %v789 = vrot.slane %v636, %v788
  %v794 = vmul.f32 %v34, %v777
  %v795 = vmul.f32 %v35, %v781
  %v796 = vmul.f32 %v36, %v777
  %v797 = vmul.f32 %v37, %v781
  %v798 = vmul.f32 %v38, %v785
  %v799 = vmul.f32 %v39, %v789
  %v800 = vmul.f32 %v40, %v785
  %v801 = vmul.f32 %v41, %v789
  %v802 = vadd.f32 %v34, %v794
  %v803 = vadd.f32 %v35, %v795
  %v804 = vadd.f32 %v36, %v796
  %v805 = vadd.f32 %v37, %v797
  %v806 = vadd.f32 %v38, %v798
  %v807 = vadd.f32 %v39, %v799
  %v808 = vadd.f32 %v40, %v800
  %v809 = vadd.f32 %v41, %v801
  %v810 = vld [vmem:[%s5] sm:$0xff]
  %v811 = vld [vmem:[%s5 + $0x8] sm:$0xff]
  %v812 = vld [vmem:[%s6] sm:$0xff]
  %v813 = vld [vmem:[%s6 + $0x8] sm:$0xff]
  %v814 = vmax.f32 %v802, %v803
  %815 = vmax.xlane.f32.xlu0 %v814
  %v816 = vpop.xlane.xlu0 %815
  %v817 = vmax.f32 %v804, %v805
  %818 = vmax.xlane.f32.xlu0 %v817
  %v819 = vpop.xlane.xlu0 %818
  %v820 = vmax.f32 %v806, %v807
  %821 = vmax.xlane.f32.xlu0 %v820
  %v822 = vpop.xlane.xlu0 %821
  %v823 = vmax.f32 %v808, %v809
  %824 = vmax.xlane.f32.xlu0 %v823
  %v825 = vpop.xlane.xlu0 %824
  %v826 = vmul.f32 %v816, %v810
  %v827 = vmul.f32 %v819, %v811
  %v828 = vmul.f32 %v822, %v810
  %v829 = vmul.f32 %v825, %v811
  %v830 = vsel %vm693, %v826, 0.0
  %v831 = vsel %vm693, %v827, 0.0
  %v832 = vadd.f32 %v830, %v831
  %v833 = vrot.slane %v832, 4
  %v834 = vadd.f32 %v832, %v833
  %v835 = vrot.slane %v834, 2
  %v836 = vadd.f32 %v834, %v835
  %v837 = vrot.slane %v836, 1
  %v838 = vadd.f32 %v836, %v837
  %v839 = vsel %vm693, %v828, 0.0
  %v840 = vsel %vm693, %v829, 0.0
  %v841 = vadd.f32 %v839, %v840
  %v842 = vrot.slane %v841, 4
  %v843 = vadd.f32 %v841, %v842
  %v844 = vrot.slane %v843, 2
  %v845 = vadd.f32 %v843, %v844
  %v846 = vrot.slane %v845, 1
  %v847 = vadd.f32 %v845, %v846
  %v848 = vmax.f32 %v838, 0.0
  %v849 = vmax.f32 %v847, 0.0
  %v850 = vmul.f32 %v848, %v812
  %v851 = vmul.f32 %v848, %v813
  %v852 = vmul.f32 %v849, %v812
  %v853 = vmul.f32 %v849, %v813
  %v854 = vadd.f32 %v850, 0.0
  %v855 = vadd.f32 %v851, 0.0
  %v856 = vadd.f32 %v852, 0.0
  %v857 = vadd.f32 %v853, 0.0
  %v858 = vxor.u32 %v854, 2147483648
  %v859 = vxor.u32 %v855, 2147483648
  %v860 = vxor.u32 %v856, 2147483648
  %v861 = vxor.u32 %v857, 2147483648
  %v862 = vmul.f32 %v858, 1.442695
  %v863 = vpow.pop %v862
  %v864 = vmul.f32 %v859, 1.442695
  %v865 = vpow.pop %v864
  %v866 = vmul.f32 %v860, 1.442695
  %v867 = vpow.pop %v866
  %v868 = vmul.f32 %v861, 1.442695
  %v869 = vpow.pop %v868
  %v870 = vadd.f32 %v863, 1.0
  %v871 = vadd.f32 %v865, 1.0
  %v872 = vadd.f32 %v867, 1.0
  %v873 = vadd.f32 %v869, 1.0
  %v874 = vrcp.pop %v870
  %v875 = vmul.f32 1.0, %v874
  %v876 = vrcp.pop %v871
  %v877 = vmul.f32 1.0, %v876
  %v878 = vrcp.pop %v872
  %v879 = vmul.f32 1.0, %v878
  %v880 = vrcp.pop %v873
  %v881 = vmul.f32 1.0, %v880
  %883 = vset.pattern.permute.xlu0 0
  %884 = vperm.xlu0 %883, %v875
  %v885 = vpop.permute.xlu0 %884
  %888 = vset.pattern.permute.xlu0 0
  %889 = vperm.xlu0 %888, %v877
  %v890 = vpop.permute.xlu0 %889
  %893 = vset.pattern.permute.xlu0 0
  %894 = vperm.xlu0 %893, %v879
  %v895 = vpop.permute.xlu0 %894
  %898 = vset.pattern.permute.xlu0 0
  %899 = vperm.xlu0 %898, %v881
  %v900 = vpop.permute.xlu0 %899
  %v902 = vmul.f32 %v34, %v885
  %v903 = vmul.f32 %v35, %v885
  %v904 = vmul.f32 %v36, %v890
  %v905 = vmul.f32 %v37, %v890
  %v906 = vmul.f32 %v38, %v895
  %v907 = vmul.f32 %v39, %v895
  %v908 = vmul.f32 %v40, %v900
  %v909 = vmul.f32 %v41, %v900
  %v910 = vmul.f32 %v766, %v902
  %v911 = vmul.f32 %v767, %v903
  %v912 = vmul.f32 %v768, %v904
  %v913 = vmul.f32 %v769, %v905
  %v914 = vmul.f32 %v770, %v906
  %v915 = vmul.f32 %v771, %v907
  %v916 = vmul.f32 %v772, %v908
  %v917 = vmul.f32 %v773, %v909
  %918 = vst [vmem:[%s7] sm:$0xff] %v910
  %919 = vst [vmem:[%s7 + $0x8] sm:$0xff] %v911
  %920 = vst [vmem:[%s7 + $0x10] sm:$0xff] %v912
  %921 = vst [vmem:[%s7 + $0x18] sm:$0xff] %v913
  %922 = vst [vmem:[%s7 + $0x40] sm:$0xff] %v914
  %923 = vst [vmem:[%s7 + $0x48] sm:$0xff] %v915
  %924 = vst [vmem:[%s7 + $0x50] sm:$0xff] %v916
  %925 = vst [vmem:[%s7 + $0x58] sm:$0xff] %v917
  %v926 = vadd.f32 %v766, %v902
  %v927 = vadd.f32 %v767, %v903
  %v928 = vadd.f32 %v768, %v904
  %v929 = vadd.f32 %v769, %v905
  %v930 = vadd.f32 %v770, %v906
  %v931 = vadd.f32 %v771, %v907
  %v932 = vadd.f32 %v772, %v908
  %v933 = vadd.f32 %v773, %v909
  %934 = vst [vmem:[%s7 + $0x20] sm:$0xff] %v926
  %935 = vst [vmem:[%s7 + $0x28] sm:$0xff] %v927
  %936 = vst [vmem:[%s7 + $0x30] sm:$0xff] %v928
  %937 = vst [vmem:[%s7 + $0x38] sm:$0xff] %v929
  %938 = vst [vmem:[%s7 + $0x60] sm:$0xff] %v930
  %939 = vst [vmem:[%s7 + $0x68] sm:$0xff] %v931
  %940 = vst [vmem:[%s7 + $0x70] sm:$0xff] %v932
  %941 = vst [vmem:[%s7 + $0x78] sm:$0xff] %v933
  // Predicated region
  $region30: #{cmfm_pallas.1} parent=0 // pred_check
    _
  $region31: #{cmfm_pallas.1} parent=0 // pred_check_branch
    %943 = sbr.rel (0) target = $region33
  $region32: #{cmfm_pallas.1} parent=0 // pred_region
    _
  $region33: #{cmfm_pallas.1} parent=0 // pred_fallthru
    _
  // Predicated region
  $region34: #{cmfm_pallas.1} parent=0 // pred_check
    _
  $region35: #{cmfm_pallas.1} parent=0 // pred_check_branch
    %945 = sbr.rel (0) target = $region37
  $region36: #{cmfm_pallas.1} parent=0 // pred_region
    _
  $region37: #{cmfm_pallas.1} parent=0 // pred_fallthru
    _

</llo_original>
